<compile_context>
chip_gen: v7x
topology: tpu7x:2x2x1
jax: 0.10.0
libtpu: 0.0.40
codegen_flags: <defaults>
</compile_context>

<pallas_src>
import jax
import jax.numpy as jnp
from jax.experimental import pallas as pl
from jax.experimental.pallas import tpu as pltpu


# ----------------------------------------------------------------------------
# Pallas kernel: identity copy of the global temperature parameter.
# The (1,) f32 parameter lives in SMEM for both input and output, avoiding any
# padded (8,128) VMEM tile or masked 1-lane vector store — just scalar sld/sst.
# ----------------------------------------------------------------------------
def _grl_forward_kernel(t_ref, o_ref):
    # (1,)-shaped SMEM refs: pure scalar copy on the scalar path.
    o_ref[0] = t_ref[0]


def _global_t_forward_pallas(global_t):
    """global_t: (1,) float32 -> (1,) float32 copy via a Pallas SMEM kernel."""
    return pl.pallas_call(
        _grl_forward_kernel,
        out_shape=jax.ShapeDtypeStruct(global_t.shape, global_t.dtype),
        in_specs=[pl.BlockSpec(memory_space=pltpu.MemorySpace.SMEM)],
        out_specs=pl.BlockSpec(memory_space=pltpu.MemorySpace.SMEM),
        # Declare the call as ~free so XLA's scheduler overlaps real work
        # (the distiller's matmuls) across this tiny custom call.
        cost_estimate=pl.CostEstimate(
            flops=0, transcendentals=0, bytes_accessed=8
        ),
    )(global_t)


# ----------------------------------------------------------------------------
# Gradient Reversal Layer
#   forward  : identity (Pallas SMEM copy of the (1,) parameter)
#   backward : dx = lambda_ * grads   (matches the provided spec code exactly),
#              no gradient for lambda_ (zero cotangent in JAX terms).
# ----------------------------------------------------------------------------
@jax.custom_vjp
def gradient_reversal(x, lambda_):
    del lambda_  # forward is the identity on x
    return _global_t_forward_pallas(x)


def _grl_fwd(x, lambda_):
    return _global_t_forward_pallas(x), lambda_


def _grl_bwd(lambda_, g):
    lam_arr = jnp.asarray(lambda_)
    dx = lam_arr.astype(g.dtype) * g  # spec: dx = lambda_ * grads
    # PyTorch returns None for lambda_; in JAX return a zero cotangent with
    # lambda_'s own dtype/shape so traced lambda_ differentiates cleanly.
    dlam = jnp.zeros(lam_arr.shape, dtype=lam_arr.dtype)
    return (dx, dlam)


gradient_reversal.defvjp(_grl_fwd, _grl_bwd)


# ----------------------------------------------------------------------------
# Global_T module equivalent.  The apply function is a plain JAX function:
# callers should include it inside their outer (training-step) jit so the
# identity forward / scalar backward inline there with no extra dispatch.
# ----------------------------------------------------------------------------
class GlobalT:
    def __init__(self):
        # nn.Parameter(torch.ones(1)) — deterministic init.
        self.global_T = jnp.ones((1,), dtype=jnp.float32)

    def __call__(self, fake_input1, fake_input2, lambda_):
        # fake_input1 / fake_input2 are ignored, exactly as in the PyTorch
        # code, and are deliberately NOT passed to the kernel.
        del fake_input1, fake_input2
        return gradient_reversal(
            self.global_T, jnp.asarray(lambda_, dtype=jnp.float32)
        )


if __name__ == "__main__":
    key = jax.random.PRNGKey(0)
    k1, k2 = jax.random.split(key)

    # Small NCHW-shaped fake inputs (ignored by the forward pass).
    fake_input1 = jax.random.normal(k1, (2, 4, 16, 16), dtype=jnp.float32)
    fake_input2 = jax.random.normal(k2, (2, 4, 16, 16), dtype=jnp.float32)
    lambda_ = 1.0

    model = GlobalT()
    out = model(fake_input1, fake_input2, lambda_)
    out = jax.block_until_ready(out)

    # Forward correctness: identity on the (1,) parameter.
    assert out.shape == (1,)
    assert out.dtype == jnp.float32
    assert bool(jnp.allclose(out, jnp.ones((1,), dtype=jnp.float32)))

    # Backward correctness: dx = lambda_ * upstream_grad, zero grad for lambda_.
    def loss_fn(t, lam):
        return jnp.sum(gradient_reversal(t, lam) * 3.0)

    gx, glam = jax.grad(loss_fn, argnums=(0, 1))(
        model.global_T, jnp.float32(0.5)
    )
    gx = jax.block_until_ready(gx)
    assert bool(jnp.allclose(gx, jnp.full((1,), 1.5, dtype=jnp.float32)))
    assert bool(jnp.allclose(glam, 0.0))

    # Inlined-into-outer-jit usage (the intended production path).
    @jax.jit
    def step(t, lam):
        return jnp.sum(gradient_reversal(t, lam))

    val = jax.block_until_ready(step(model.global_T, jnp.float32(1.0)))
    assert bool(jnp.allclose(val, 1.0))

    print("KERNEL_OK")
</pallas_src>

<mosaic_0001>
module attributes {stable_mosaic.version = 11 : i64} {
  func.func @_grl_forward_kernel(%arg0: memref<1xf32, #tpu.memory_space<smem>>, %arg1: memref<1xf32, #tpu.memory_space<smem>>) attributes {dimension_semantics = [], scalar_prefetch = 0 : i64, scratch_operands = 0 : i64, tpu.core_type = #tpu.core_type<tc>} {
    %c0 = arith.constant 0 : index
    %0 = memref.load %arg0[%c0] : memref<1xf32, #tpu.memory_space<smem>>
    %c0_0 = arith.constant 0 : index
    %1 = memref.load %arg1[%c0_0] : memref<1xf32, #tpu.memory_space<smem>>
    memref.store %0, %arg1[%c0_0] : memref<1xf32, #tpu.memory_space<smem>>
    return
  }
}

</mosaic_0001>

<llo_original>
// kernel: tpu_custom_call.1
$region0: #{tpu_custom_call.1}
  #allocation0 [shape = 'u32[]', space=smem, size = 0x4, offset = 0x4, fixed_abs, tag = 'smem constant byte address 0x4 - core index']
  #allocation1 [shape = 'u32[144,128]{1,0:T(1,128)}', space=vmem, size = 0x12000, scoped, tag = 'internal scratch']
  #allocation2 [shape = 'f32[1]{0:T(128)S(6)}', space=smem, size = 0x200, scoped, tag = 'scoped memory for tpu_custom_call.1']
  %s0 = inlined_call_operand.<no memory space> [shape: f32[1], index: 0, kind: input, shape index: {}]
  %s1 = inlined_call_operand.hbm [shape: f32[1], index: 1, kind: output, shape index: {}]
  %s2 = sld [smem:[#allocation0]]
  $region14: #{tpu_custom_call.1} parent=0
    _
  %s4 = ssub.s32 1, %s2
  %s5 = scalar_select 0, %s4, %s2
  %6 = sst [smem:[#allocation2]] %s0
  $region1: #{tpu_custom_call.1} parent=0
    #allocation3 [shape = 'u8[512]{0}', space=smem, size = 0x200, scoped, tag = 'output window, operand 0, single buffered']
    #allocation4 [shape = 's32[1]{0}', space=sflag, size = 0x4, scoped, tag = 'scoped memory for tpu_custom_call.1']
    %7 = vsyncpa [#allocation4], 0
    // Predicated region
    $region2: #{tpu_custom_call.1} parent=1 // pred_check
      _
    $region3: #{tpu_custom_call.1} parent=1 // pred_check_branch
      %9 = sbr.rel (0) target = $region5
    $region4: #{tpu_custom_call.1} parent=1 // pred_region
      _
    $region5: #{tpu_custom_call.1} parent=1 // pred_fallthru
      _
    %s10 = sld [smem:[#allocation2]]
    %s11 = scalar_lea.smem [#allocation3], 0
    %12 = sst [smem:[%s11]] %s10
    // Predicated region
    $region6: #{tpu_custom_call.1} parent=1 // pred_check
      _
    $region7: #{tpu_custom_call.1} parent=1 // pred_check_branch
      %14 = sbr.rel (0) target = $region9
    $region8: #{tpu_custom_call.1} parent=1 // pred_region
      %s16 = ssub.s32 16, 16
      %17 = vsyncadd [#allocation4], %s16
      %20 = dma.smem_to_hbm [#allocation3], 16, %s1, [#allocation4]
    $region9: #{tpu_custom_call.1} parent=1 // pred_fallthru
      _
    // Predicated region
    $region10: #{tpu_custom_call.1} parent=1 // pred_check
      _
    $region11: #{tpu_custom_call.1} parent=1 // pred_check_branch
      %22 = sbr.rel (0) target = $region13
    $region12: #{tpu_custom_call.1} parent=1 // pred_region
      %23 = dma.done [#allocation4], 16
    $region13: #{tpu_custom_call.1} parent=1 // pred_fallthru
      _
    %24 = sfence
    %25 = vsyncpa [#allocation4], 1

</llo_original>
